<compile_context>
chip_gen: v7x
topology: tpu7x:2x2x1
jax: 0.10.0
libtpu: 0.0.40
codegen_flags: <defaults>
</compile_context>

<pallas_src>
import functools

import numpy as np
import jax
import jax.numpy as jnp
from jax.experimental import pallas as pl
from jax.experimental.pallas import tpu as pltpu


def _iwt_kernel(x1_ref, x2_ref, x3_ref, x4_ref, g_ref, o_ref):
    """One (batch, channel-block) tile of the IWT.

    x{1..4}_ref: (cb, H, W)   raw (un-halved) input groups
    g_ref      : (4W, 4W)     constant combine+interleave matrix (includes the /2)
    o_ref      : (cb*H, 4W)   out[row=ch*H+i, di*2W + 2j + dj] = h[ch, 2i+di, 2j+dj]
    """
    cb, H, W = x1_ref.shape
    x1 = x1_ref[...].reshape(cb * H, W)
    x2 = x2_ref[...].reshape(cb * H, W)
    x3 = x3_ref[...].reshape(cb * H, W)
    x4 = x4_ref[...].reshape(cb * H, W)
    # Single fused matmul: lane-concat the 4 groups (contraction depth 4W) so the
    # MXU is pushed once per tile instead of 4 tiny times.
    xcat = jnp.concatenate([x1, x2, x3, x4], axis=-1)              # (cb*H, 4W)
    out = jnp.dot(xcat, g_ref[...], preferred_element_type=jnp.float32)
    o_ref[...] = out.astype(o_ref.dtype)


def _build_iwt_matrix(W):
    """G[g*W + j, di*2W + 2j + dj] = 0.5 * coef[g, di, dj]."""
    coef = np.empty((4, 2, 2), np.float32)
    coef[0] = [[1.0, 1.0], [1.0, 1.0]]      # x1
    coef[1] = [[-1.0, 1.0], [-1.0, 1.0]]    # x2: sign follows dj
    coef[2] = [[-1.0, -1.0], [1.0, 1.0]]    # x3: sign follows di
    coef[3] = [[1.0, -1.0], [-1.0, 1.0]]    # x4: +1 iff di == dj
    G = np.zeros((4 * W, 4 * W), np.float32)
    j = np.arange(W)
    for g in range(4):
        for di in range(2):
            for dj in range(2):
                G[g * W + j, di * 2 * W + 2 * j + dj] = 0.5 * coef[g, di, dj]
    return G


@jax.jit
def iwt_forward(x):
    """Pallas equivalent of IWT.forward / iwt_init (NCHW in, NCHW out)."""
    N, C, H, W = x.shape
    assert C % 4 == 0, "IWT requires in_channels divisible by 4"
    c = C // 4

    # Channel-block size: keep each tile's VMEM footprint modest (accounts for the
    # 128-lane padding of the W axis) and make it divide c exactly.
    lane = 128
    padded_w = -(-W // lane) * lane
    per_out_ch_bytes = (4 * H * padded_w + H * max(4 * W, lane)) * 4
    budget = 4 << 20
    cb = max(1, min(c, budget // max(per_out_ch_bytes, 1)))
    while c % cb:
        cb -= 1
    num_cb = c // cb

    # TODO(synk): for very large W the dense (4W,4W) G wastes MXU depth (only 4
    # taps per column are nonzero); split into per-group (W,4W) factors if needed.
    G = jnp.asarray(_build_iwt_matrix(W), dtype=x.dtype)

    # The same x is passed four times; each spec pulls a *disjoint* channel slice
    # (one wavelet group), so total input HBM traffic is still exactly one read.
    in_specs = [
        pl.BlockSpec((None, cb, H, W),
                     lambda n, cbi, g=g: (n, g * num_cb + cbi, 0, 0))
        for g in range(4)
    ] + [
        pl.BlockSpec((4 * W, 4 * W), lambda n, cbi: (0, 0)),
    ]

    out_flat = pl.pallas_call(
        _iwt_kernel,
        out_shape=jax.ShapeDtypeStruct((N, c * H, 4 * W), x.dtype),
        grid=(N, num_cb),
        in_specs=in_specs,
        out_specs=pl.BlockSpec((None, cb * H, 4 * W),
                               lambda n, cbi: (n, cbi, 0)),
        compiler_params=pltpu.CompilerParams(
            dimension_semantics=("parallel", "parallel")),
    )(x, x, x, x, G)

    # (N, c*H, 4W) -> (N, c, H, 2, W, 2) -> (N, c, 2H, 2W): pure row-major merge,
    # free at the HBM level (no transpose / data movement).
    return out_flat.reshape(N, c, 2 * H, 2 * W)


if __name__ == "__main__":
    N, C, H, W = 2, 4, 16, 16
    key = jax.random.PRNGKey(0)
    x = jax.random.normal(key, (N, C, H, W), dtype=jnp.float32)

    out = iwt_forward(x)
    out = jax.block_until_ready(out)

    # Pure-JAX reference of iwt_init.
    c = C // 4
    x1 = x[:, 0 * c:1 * c] / 2
    x2 = x[:, 1 * c:2 * c] / 2
    x3 = x[:, 2 * c:3 * c] / 2
    x4 = x[:, 3 * c:4 * c] / 2
    ref = jnp.zeros((N, c, 2 * H, 2 * W), x.dtype)
    ref = ref.at[:, :, 0::2, 0::2].set(x1 - x2 - x3 + x4)
    ref = ref.at[:, :, 1::2, 0::2].set(x1 - x2 + x3 - x4)
    ref = ref.at[:, :, 0::2, 1::2].set(x1 + x2 - x3 - x4)
    ref = ref.at[:, :, 1::2, 1::2].set(x1 + x2 + x3 + x4)

    assert out.shape == (N, c, 2 * H, 2 * W)
    assert jnp.allclose(out, ref, atol=1e-5, rtol=1e-5)
    print("KERNEL_OK")
</pallas_src>

<mosaic_0001>
module attributes {stable_mosaic.version = 11 : i64} {
  func.func @_iwt_kernel(%arg0: i32, %arg1: i32, %arg2: memref<1x1x16x16xf32, #tpu.memory_space<vmem>>, %arg3: memref<1x1x16x16xf32, #tpu.memory_space<vmem>>, %arg4: memref<1x1x16x16xf32, #tpu.memory_space<vmem>>, %arg5: memref<1x1x16x16xf32, #tpu.memory_space<vmem>>, %arg6: memref<64x64xf32, #tpu.memory_space<vmem>>, %arg7: memref<1x16x64xf32, #tpu.memory_space<vmem>>) attributes {dimension_semantics = [#tpu.dimension_semantics<parallel>, #tpu.dimension_semantics<parallel>], iteration_bounds = array<i64: 2, 1>, scalar_prefetch = 0 : i64, scratch_operands = 0 : i64, tpu.core_type = #tpu.core_type<tc>, window_params = [{transform_indices = @transform_0, window_bounds = array<i64: 1, 1, 16, 16>}, {transform_indices = @transform_1, window_bounds = array<i64: 1, 1, 16, 16>}, {transform_indices = @transform_2, window_bounds = array<i64: 1, 1, 16, 16>}, {transform_indices = @transform_3, window_bounds = array<i64: 1, 1, 16, 16>}, {pipeline_mode = #tpu.pipeline_mode<synchronous>, transform_indices = @transform_4, window_bounds = array<i64: 64, 64>}, {transform_indices = @transform_5, window_bounds = array<i64: 1, 16, 64>}]} {
    %c0 = arith.constant 0 : index
    %c0_0 = arith.constant 0 : index
    %c0_1 = arith.constant 0 : index
    %c0_2 = arith.constant 0 : index
    %0 = vector.load %arg2[%c0, %c0_0, %c0_1, %c0_2] : memref<1x1x16x16xf32, #tpu.memory_space<vmem>>, vector<1x1x16x16xf32>
    %1 = vector.shape_cast %0 : vector<1x1x16x16xf32> to vector<1x16x16xf32>
    %2 = vector.shape_cast %1 : vector<1x16x16xf32> to vector<16x16xf32>
    %c0_3 = arith.constant 0 : index
    %c0_4 = arith.constant 0 : index
    %c0_5 = arith.constant 0 : index
    %c0_6 = arith.constant 0 : index
    %3 = vector.load %arg3[%c0_3, %c0_4, %c0_5, %c0_6] : memref<1x1x16x16xf32, #tpu.memory_space<vmem>>, vector<1x1x16x16xf32>
    %4 = vector.shape_cast %3 : vector<1x1x16x16xf32> to vector<1x16x16xf32>
    %5 = vector.shape_cast %4 : vector<1x16x16xf32> to vector<16x16xf32>
    %c0_7 = arith.constant 0 : index
    %c0_8 = arith.constant 0 : index
    %c0_9 = arith.constant 0 : index
    %c0_10 = arith.constant 0 : index
    %6 = vector.load %arg4[%c0_7, %c0_8, %c0_9, %c0_10] : memref<1x1x16x16xf32, #tpu.memory_space<vmem>>, vector<1x1x16x16xf32>
    %7 = vector.shape_cast %6 : vector<1x1x16x16xf32> to vector<1x16x16xf32>
    %8 = vector.shape_cast %7 : vector<1x16x16xf32> to vector<16x16xf32>
    %c0_11 = arith.constant 0 : index
    %c0_12 = arith.constant 0 : index
    %c0_13 = arith.constant 0 : index
    %c0_14 = arith.constant 0 : index
    %9 = vector.load %arg5[%c0_11, %c0_12, %c0_13, %c0_14] : memref<1x1x16x16xf32, #tpu.memory_space<vmem>>, vector<1x1x16x16xf32>
    %10 = vector.shape_cast %9 : vector<1x1x16x16xf32> to vector<1x16x16xf32>
    %11 = vector.shape_cast %10 : vector<1x16x16xf32> to vector<16x16xf32>
    %12 = tpu.concatenate %2, %5, %8, %11 in 1 : vector<16x16xf32>, vector<16x16xf32>, vector<16x16xf32>, vector<16x16xf32> -> vector<16x64xf32>
    %c0_15 = arith.constant 0 : index
    %c0_16 = arith.constant 0 : index
    %13 = vector.load %arg6[%c0_15, %c0_16] : memref<64x64xf32, #tpu.memory_space<vmem>>, vector<64x64xf32>
    %cst = arith.constant dense<0.000000e+00> : vector<16x64xf32>
    %14 = tpu.matmul %12, %13, %cst {dimension_numbers = #tpu.dot_dimension_numbers<[1], [0], [0], [1], [0, 0, 1, 1], [], []>} : vector<16x64xf32>, vector<64x64xf32>, vector<16x64xf32> -> vector<16x64xf32>
    %c0_17 = arith.constant 0 : index
    %c0_18 = arith.constant 0 : index
    %c0_19 = arith.constant 0 : index
    %15 = vector.load %arg7[%c0_17, %c0_18, %c0_19] : memref<1x16x64xf32, #tpu.memory_space<vmem>>, vector<1x16x64xf32>
    %16 = vector.shape_cast %15 : vector<1x16x64xf32> to vector<16x64xf32>
    %17 = vector.shape_cast %14 : vector<16x64xf32> to vector<1x16x64xf32>
    tpu.vector_store %arg7[%c0_17, %c0_18, %c0_19], %17 {strides = array<i32>} : memref<1x16x64xf32, #tpu.memory_space<vmem>>, vector<1x16x64xf32>,
    return
  }
  func.func @transform_0(%arg0: i32, %arg1: i32) -> (i32, i32, i32, i32) {
    %c0_i32 = arith.constant 0 : i32
    %0 = arith.addi %c0_i32, %arg1 : i32
    %c0_i32_0 = arith.constant 0 : i32
    %c0_i32_1 = arith.constant 0 : i32
    %c0_i32_2 = arith.constant 0 : i32
    return %arg0, %0, %c0_i32_0, %c0_i32_1 : i32, i32, i32, i32
  }
  func.func @transform_1(%arg0: i32, %arg1: i32) -> (i32, i32, i32, i32) {
    %c1_i32 = arith.constant 1 : i32
    %0 = arith.addi %c1_i32, %arg1 : i32
    %c0_i32 = arith.constant 0 : i32
    %c0_i32_0 = arith.constant 0 : i32
    %c0_i32_1 = arith.constant 0 : i32
    return %arg0, %0, %c0_i32, %c0_i32_0 : i32, i32, i32, i32
  }
  func.func @transform_2(%arg0: i32, %arg1: i32) -> (i32, i32, i32, i32) {
    %c2_i32 = arith.constant 2 : i32
    %0 = arith.addi %c2_i32, %arg1 : i32
    %c0_i32 = arith.constant 0 : i32
    %c0_i32_0 = arith.constant 0 : i32
    %c0_i32_1 = arith.constant 0 : i32
    return %arg0, %0, %c0_i32, %c0_i32_0 : i32, i32, i32, i32
  }
  func.func @transform_3(%arg0: i32, %arg1: i32) -> (i32, i32, i32, i32) {
    %c3_i32 = arith.constant 3 : i32
    %0 = arith.addi %c3_i32, %arg1 : i32
    %c0_i32 = arith.constant 0 : i32
    %c0_i32_0 = arith.constant 0 : i32
    %c0_i32_1 = arith.constant 0 : i32
    return %arg0, %0, %c0_i32, %c0_i32_0 : i32, i32, i32, i32
  }
  func.func @transform_4(%arg0: i32, %arg1: i32) -> (i32, i32) {
    %c0_i32 = arith.constant 0 : i32
    %c0_i32_0 = arith.constant 0 : i32
    %c0_i32_1 = arith.constant 0 : i32
    return %c0_i32, %c0_i32_0 : i32, i32
  }
  func.func @transform_5(%arg0: i32, %arg1: i32) -> (i32, i32, i32) {
    %c0_i32 = arith.constant 0 : i32
    %c0_i32_0 = arith.constant 0 : i32
    return %arg0, %arg1, %c0_i32 : i32, i32, i32
  }
}

</mosaic_0001>

<llo_original>
// kernel: iwt_forward.1
$region0: #{iwt_forward.1}
  #allocation0 [shape = 'u32[]', space=smem, size = 0x4, offset = 0x4, fixed_abs, tag = 'smem constant byte address 0x4 - core index']
  #allocation1 [shape = 'u32[144,128]{1,0:T(1,128)}', space=vmem, size = 0x12000, scoped, tag = 'internal scratch']
  %s0 = inlined_call_operand.hbm [shape: f32[2,4,16,16], index: 0, kind: input, shape index: {}, may-alias: {0,1,2,3}]
  %s1 = inlined_call_operand.hbm [shape: f32[2,4,16,16], index: 1, kind: input, shape index: {}, may-alias: {0,1,2,3}]
  %s2 = inlined_call_operand.hbm [shape: f32[2,4,16,16], index: 2, kind: input, shape index: {}, may-alias: {0,1,2,3}]
  %s3 = inlined_call_operand.hbm [shape: f32[2,4,16,16], index: 3, kind: input, shape index: {}, may-alias: {0,1,2,3}]
  %s4 = inlined_call_operand.hbm [shape: f32[64,64], index: 4, kind: input, shape index: {}]
  %s5 = inlined_call_operand.vmem [shape: f32[2,16,64], index: 5, kind: output, shape index: {}]
  %s6 = sld [smem:[#allocation0]]
  $region73: #{iwt_forward.1} parent=0
    _
  %s8 = ssub.s32 1, %s6
  %s9 = scalar_select 0, %s8, %s6
  $region1: #{iwt_forward.1} parent=0
    #allocation2 [shape = 'u8[16384]{0}', space=vmem, size = 0x4000, scoped, tag = 'input window, operand 0']
    #allocation3 [shape = 's32[2]{0}', space=sflag, size = 0x8, scoped, tag = 'scoped memory for iwt_forward.1']
    #allocation4 [shape = 'u8[16384]{0}', space=vmem, size = 0x4000, scoped, tag = 'input window, operand 1']
    #allocation5 [shape = 's32[2]{0}', space=sflag, size = 0x8, scoped, tag = 'scoped memory for iwt_forward.1']
    #allocation6 [shape = 'u8[16384]{0}', space=vmem, size = 0x4000, scoped, tag = 'input window, operand 2']
    #allocation7 [shape = 'u8[16384]{0}', space=vmem, size = 0x4000, scoped, tag = 'input window, operand 3']
    #allocation8 [shape = 's32[2]{0}', space=sflag, size = 0x8, scoped, tag = 'scoped memory for iwt_forward.1']
    #allocation9 [shape = 'u8[32768]{0}', space=vmem, size = 0x8000, scoped, tag = 'input window, operand 4, single buffered']
    %10 = vsyncpa [#allocation3], 0
    %s11 = scalar_lea.sflag [#allocation3], 1
    %12 = vsyncpa %s11, 0
    %13 = vsyncpa [#allocation5], 0
    %s14 = scalar_lea.sflag [#allocation5], 1
    %15 = vsyncpa %s14, 0
    %16 = vsyncpa [#allocation8], 0
    %s17 = scalar_lea.sflag [#allocation8], 1
    %18 = vsyncpa %s17, 0
    loop: start=0, step=1, limit=4
    $region2: #{iwt_forward.1} parent=1 // loop_pre_header
      _
    $region3: #{iwt_forward.1} parent=1 // loop_header
      %s20 = sphi 0, %s24
      %p21 = scmp.ge.s32.totalorder %s20, 4
      %s27 = sphi 0, %s39
      %s28 = sphi 0, %s35
      %s29 = sphi 0, %s27
      %s30 = sphi 0, %s28
      %s31 = sphi 0, %s29
      %s32 = sphi 0, %s30
      %s44 = sphi 0, %s46
      %s47 = sphi 0, %s44
      %s48 = sphi 0, %s47
      %s64 = sphi 0, %s48
      %s74 = sphi 0, %s76
      %s77 = sphi 0, %s74
      %s78 = sphi 0, %s77
      %s94 = sphi 0, %s78
      %s104 = sphi 0, %s106
      %s107 = sphi 0, %s104
      %s108 = sphi 0, %s107
      %s124 = sphi 0, %s108
      %s134 = sphi 0, %s136
      %s137 = sphi 0, %s134
      %s138 = sphi 0, %s137
      %s154 = sphi 0, %s138
      %s158 = sphi 0, %s158
      %s160 = sphi 0, %s158
      %s161 = sphi 0, %s160
      %s175 = sphi 0, %s161
      %s183 = sphi 0, %s185
      %s186 = sphi 0, %s183
      %s187 = sphi 0, %s186
      %s203 = sphi 0, %s187
    $region4: #{iwt_forward.1} parent=1 // loop_header_branch
      %23 = sbr.rel (%p21) target = $region8
    $region5: #{iwt_forward.1} parent=1 // loop_body
      %s25 = ssub.s32 %s20, 1
      %s26 = ssub.s32 %s20, 2
      %s33 = sadd.s32 1, %s28
      %p34 = scmp.ge.s32.totalorder %s33, 1
      %s35 = scalar_select %p34, 0, %s33
      %s36 = sadd.s32 1, %s27
      %s37 = scalar_select %p34, %s36, %s27
      %p38 = scmp.ge.s32.totalorder %s37, 2
      %s39 = scalar_select %p38, 0, %s37
      %s40 = ssub.s32 %s27, %s39
      %s41 = ssub.s32 %s28, %s35
      %s42 = sor.u32 %s40, %s41
      %p43 = scmp.eq.s32.totalorder %s42, 0
      %s45 = sadd.s32 %s44, 1
      %s46 = scalar_select %p43, %s44, %s45
      %p49 = pneg %p43
      %p50 = scmp.eq.s32.totalorder %s20, 1
      %p51 = por %p49, %p50
      %p52 = scmp.ne.s32.totalorder %s44, %s47
      %p53 = scmp.eq.s32.totalorder %s20, 0
      %p54 = por %p52, %p53
      %p55 = scmp.ne.s32.totalorder %s44, %s47
      %p56 = scmp.eq.s32.totalorder %s25, 1
      %p57 = por %p55, %p56
      %p58 = scmp.ne.s32.totalorder %s47, %s48
      %p59 = scmp.eq.s32.totalorder %s25, 0
      %p60 = por %p58, %p59
      %p61 = scmp.ne.s32.totalorder %s47, %s48
      %p62 = scmp.eq.s32.totalorder %s26, 1
      %p63 = por %p61, %p62
      %p65 = scmp.ne.s32.totalorder %s48, %s64
      %p66 = scmp.eq.s32.totalorder %s26, 0
      %p67 = por %p65, %p66
      %s68 = sadd.s32 %s28, 1
      %s69 = sadd.s32 %s35, 1
      %s70 = ssub.s32 %s27, %s39
      %s71 = ssub.s32 %s68, %s69
      %s72 = sor.u32 %s70, %s71
      %p73 = scmp.eq.s32.totalorder %s72, 0
      %s75 = sadd.s32 %s74, 1
      %s76 = scalar_select %p73, %s74, %s75
      %p79 = pneg %p73
      %p80 = scmp.eq.s32.totalorder %s20, 1
      %p81 = por %p79, %p80
      %p82 = scmp.ne.s32.totalorder %s74, %s77
      %p83 = scmp.eq.s32.totalorder %s20, 0
      %p84 = por %p82, %p83
      %p85 = scmp.ne.s32.totalorder %s74, %s77
      %p86 = scmp.eq.s32.totalorder %s25, 1
      %p87 = por %p85, %p86
      %p88 = scmp.ne.s32.totalorder %s77, %s78
      %p89 = scmp.eq.s32.totalorder %s25, 0
      %p90 = por %p88, %p89
      %p91 = scmp.ne.s32.totalorder %s77, %s78
      %p92 = scmp.eq.s32.totalorder %s26, 1
      %p93 = por %p91, %p92
      %p95 = scmp.ne.s32.totalorder %s78, %s94
      %p96 = scmp.eq.s32.totalorder %s26, 0
      %p97 = por %p95, %p96
      %s98 = sadd.s32 %s28, 2
      %s99 = sadd.s32 %s35, 2
      %s100 = ssub.s32 %s27, %s39
      %s101 = ssub.s32 %s98, %s99
      %s102 = sor.u32 %s100, %s101
      %p103 = scmp.eq.s32.totalorder %s102, 0
      %s105 = sadd.s32 %s104, 1
      %s106 = scalar_select %p103, %s104, %s105
      %p109 = pneg %p103
      %p110 = scmp.eq.s32.totalorder %s20, 1
      %p111 = por %p109, %p110
      %p112 = scmp.ne.s32.totalorder %s104, %s107
      %p113 = scmp.eq.s32.totalorder %s20, 0
      %p114 = por %p112, %p113
      %p115 = scmp.ne.s32.totalorder %s104, %s107
      %p116 = scmp.eq.s32.totalorder %s25, 1
      %p117 = por %p115, %p116
      %p118 = scmp.ne.s32.totalorder %s107, %s108
      %p119 = scmp.eq.s32.totalorder %s25, 0
      %p120 = por %p118, %p119
      %p121 = scmp.ne.s32.totalorder %s107, %s108
      %p122 = scmp.eq.s32.totalorder %s26, 1
      %p123 = por %p121, %p122
      %p125 = scmp.ne.s32.totalorder %s108, %s124
      %p126 = scmp.eq.s32.totalorder %s26, 0
      %p127 = por %p125, %p126
      %s128 = sadd.s32 %s28, 3
      %s129 = sadd.s32 %s35, 3
      %s130 = ssub.s32 %s27, %s39
      %s131 = ssub.s32 %s128, %s129
      %s132 = sor.u32 %s130, %s131
      %p133 = scmp.eq.s32.totalorder %s132, 0
      %s135 = sadd.s32 %s134, 1
      %s136 = scalar_select %p133, %s134, %s135
      %p139 = pneg %p133
      %p140 = scmp.eq.s32.totalorder %s20, 1
      %p141 = por %p139, %p140
      %p142 = scmp.ne.s32.totalorder %s134, %s137
      %p143 = scmp.eq.s32.totalorder %s20, 0
      %p144 = por %p142, %p143
      %p145 = scmp.ne.s32.totalorder %s134, %s137
      %p146 = scmp.eq.s32.totalorder %s25, 1
      %p147 = por %p145, %p146
      %p148 = scmp.ne.s32.totalorder %s137, %s138
      %p149 = scmp.eq.s32.totalorder %s25, 0
      %p150 = por %p148, %p149
      %p151 = scmp.ne.s32.totalorder %s137, %s138
      %p152 = scmp.eq.s32.totalorder %s26, 1
      %p153 = por %p151, %p152
      %p155 = scmp.ne.s32.totalorder %s138, %s154
      %p156 = scmp.eq.s32.totalorder %s26, 0
      %p157 = por %p155, %p156
      %s159 = sadd.s32 %s158, 1
      %p162 = scmp.eq.s32.totalorder %s20, 1
      %p163 = scmp.ne.s32.totalorder %s158, %s160
      %p164 = scmp.eq.s32.totalorder %s20, 0
      %p165 = por %p163, %p164
      %p166 = scmp.ne.s32.totalorder %s158, %s160
      %p167 = scmp.eq.s32.totalorder %s25, 1
      %p168 = por %p166, %p167
      %p169 = scmp.ne.s32.totalorder %s160, %s161
      %p170 = scmp.eq.s32.totalorder %s25, 0
      %p171 = por %p169, %p170
      %p172 = scmp.ne.s32.totalorder %s160, %s161
      %p173 = scmp.eq.s32.totalorder %s26, 1
      %p174 = por %p172, %p173
      %p176 = scmp.ne.s32.totalorder %s161, %s175
      %p177 = scmp.eq.s32.totalorder %s26, 0
      %p178 = por %p176, %p177
      %s179 = ssub.s32 %s27, %s39
      %s180 = ssub.s32 %s28, %s35
      %s181 = sor.u32 %s179, %s180
      %p182 = scmp.eq.s32.totalorder %s181, 0
      %s184 = sadd.s32 %s183, 1
      %s185 = scalar_select %p182, %s183, %s184
      %p188 = pneg %p182
      %p189 = scmp.eq.s32.totalorder %s20, 1
      %p190 = por %p188, %p189
      %p191 = scmp.ne.s32.totalorder %s183, %s186
      %p192 = scmp.eq.s32.totalorder %s20, 0
      %p193 = por %p191, %p192
      %p194 = scmp.ne.s32.totalorder %s183, %s186
      %p195 = scmp.eq.s32.totalorder %s25, 1
      %p196 = por %p194, %p195
      %p197 = scmp.ne.s32.totalorder %s186, %s187
      %p198 = scmp.eq.s32.totalorder %s25, 0
      %p199 = por %p197, %p198
      %p200 = scmp.ne.s32.totalorder %s186, %s187
      %p201 = scmp.eq.s32.totalorder %s26, 1
      %p202 = por %p200, %p201
      %p204 = scmp.ne.s32.totalorder %s187, %s203
      %p205 = scmp.eq.s32.totalorder %s26, 0
      %p206 = por %p204, %p205
      %p207 = scmp.le.s32.totalorder 1, %s20
      %p208 = scmp.lt.s32.totalorder %s20, 3
      %p209 = pnand %p207, %p208
      %p210 = pneg %p209
      // Predicated region
      $region9: #{iwt_forward.1} parent=5 // pred_check
        _
      $region10: #{iwt_forward.1} parent=5 // pred_check_branch
        %212 = sbr.rel (%p209) target = $region12
      $region11: #{iwt_forward.1} parent=5 // pred_region
        %s213 = ssub.s32 %s20, 1
        // Predicated region
        $region13: #{iwt_forward.1} parent=11 // pred_check
          %p214 = pneg %p171
        $region14: #{iwt_forward.1} parent=11 // pred_check_branch
          %216 = sbr.rel (%p214) target = $region16
        $region15: #{iwt_forward.1} parent=11 // pred_region
          %s218 = ssub.s32 1024, 1024
          %219 = vsyncadd [#allocation8], %s218
          %s220 = sshll.u32 [#allocation9], 4
          %s221 = int_to_ptr.vmem [resolvable:$true] %s220
          %226 = dma.hbm_to_vmem [thread:$0]  %s4, 1024, %s221, [#allocation8], 128, 128, 8
        $region16: #{iwt_forward.1} parent=11 // pred_fallthru
          _
      $region12: #{iwt_forward.1} parent=5 // pred_fallthru
        _
      %p227 = scmp.lt.s32.totalorder %s20, 2
      // Predicated region
      $region17: #{iwt_forward.1} parent=5 // pred_check
        %p228 = pneg %p227
      $region18: #{iwt_forward.1} parent=5 // pred_check_branch
        %230 = sbr.rel (%p228) target = $region20
      $region19: #{iwt_forward.1} parent=5 // pred_region
        // Predicated region
        $region21: #{iwt_forward.1} parent=19 // pred_check
          %p231 = pneg %p54
        $region22: #{iwt_forward.1} parent=19 // pred_check_branch
          %233 = sbr.rel (%p231) target = $region24
        $region23: #{iwt_forward.1} parent=19 // pred_region
          %s234 = sand.u32 %s44, 1
          %s235 = scalar_lea.sflag [#allocation3], %s234
          %s236 = sand.u32 %s44, 1
          %s237 = smul.addr %s236, 16
          %s238 = scalar_lea.vmem [#allocation2], %s237
          %s240 = ssub.s32 256, 256
          %241 = vsyncadd %s235, %s240
          %s242 = smul.addr %s28, 2
          %s243 = smul.addr %s27, 8
          %s244 = sadd.s32 %s242, %s243
          %s245 = smul.addr %s244, 128
          %s246 = scalar_lea.hbm %s0, %s245
          %s247 = sshll.u32 %s238, 4
          %s248 = int_to_ptr.vmem [resolvable:$true] %s247
          %253 = dma.hbm_to_vmem [thread:$0]  %s246, 256, %s248, %s235, 128, 128, 8
        $region24: #{iwt_forward.1} parent=19 // pred_fallthru
          _
        // Predicated region
        $region25: #{iwt_forward.1} parent=19 // pred_check
          %p254 = pneg %p84
        $region26: #{iwt_forward.1} parent=19 // pred_check_branch
          %256 = sbr.rel (%p254) target = $region28
        $region27: #{iwt_forward.1} parent=19 // pred_region
          %s257 = sand.u32 %s20, 1
          %s258 = scalar_lea.sflag [#allocation5], %s257
          %s259 = sand.u32 %s74, 1
          %s260 = smul.addr %s259, 16
          %s261 = scalar_lea.vmem [#allocation4], %s260
          %s262 = sadd.s32 %s28, 1
          %s264 = ssub.s32 256, 256
          %265 = vsyncadd %s258, %s264
          %s266 = smul.addr %s262, 2
          %s267 = smul.addr %s27, 8
          %s268 = sadd.s32 %s266, %s267
          %s269 = smul.addr %s268, 128
          %s270 = scalar_lea.hbm %s1, %s269
          %s271 = sshll.u32 %s261, 4
          %s272 = int_to_ptr.vmem [resolvable:$true] %s271
          %277 = dma.hbm_to_vmem [thread:$0]  %s270, 256, %s272, %s258, 128, 128, 8
        $region28: #{iwt_forward.1} parent=19 // pred_fallthru
          _
        // Predicated region
        $region29: #{iwt_forward.1} parent=19 // pred_check
          %p278 = pneg %p114
        $region30: #{iwt_forward.1} parent=19 // pred_check_branch
          %280 = sbr.rel (%p278) target = $region32
        $region31: #{iwt_forward.1} parent=19 // pred_region
          %s281 = sand.u32 %s20, 1
          %s282 = scalar_lea.sflag [#allocation5], %s281
          %s283 = sand.u32 %s104, 1
          %s284 = smul.addr %s283, 16
          %s285 = scalar_lea.vmem [#allocation6], %s284
          %s286 = sadd.s32 %s28, 2
          %s288 = ssub.s32 256, 256
          %289 = vsyncadd %s282, %s288
          %s290 = smul.addr %s286, 2
          %s291 = smul.addr %s27, 8
          %s292 = sadd.s32 %s290, %s291
          %s293 = smul.addr %s292, 128
          %s294 = scalar_lea.hbm %s2, %s293
          %s295 = sshll.u32 %s285, 4
          %s296 = int_to_ptr.vmem [resolvable:$true] %s295
          %301 = dma.hbm_to_vmem [thread:$0]  %s294, 256, %s296, %s282, 128, 128, 8
        $region32: #{iwt_forward.1} parent=19 // pred_fallthru
          _
        // Predicated region
        $region33: #{iwt_forward.1} parent=19 // pred_check
          %p302 = pneg %p144
        $region34: #{iwt_forward.1} parent=19 // pred_check_branch
          %304 = sbr.rel (%p302) target = $region36
        $region35: #{iwt_forward.1} parent=19 // pred_region
          %s305 = sand.u32 %s20, 1
          %s306 = scalar_lea.sflag [#allocation8], %s305
          %s307 = sand.u32 %s134, 1
          %s308 = smul.addr %s307, 16
          %s309 = scalar_lea.vmem [#allocation7], %s308
          %s310 = sadd.s32 %s28, 3
          %s312 = ssub.s32 256, 256
          %313 = vsyncadd %s306, %s312
          %s314 = smul.addr %s310, 2
          %s315 = smul.addr %s27, 8
          %s316 = sadd.s32 %s314, %s315
          %s317 = smul.addr %s316, 128
          %s318 = scalar_lea.hbm %s3, %s317
          %s319 = sshll.u32 %s309, 4
          %s320 = int_to_ptr.vmem [resolvable:$true] %s319
          %325 = dma.hbm_to_vmem [thread:$0]  %s318, 256, %s320, %s306, 128, 128, 8
        $region36: #{iwt_forward.1} parent=19 // pred_fallthru
          _
      $region20: #{iwt_forward.1} parent=5 // pred_fallthru
        _
      %p326 = scmp.le.s32.totalorder 1, %s20
      %p327 = scmp.lt.s32.totalorder %s20, 3
      %p328 = pnand %p326, %p327
      %p329 = pneg %p328
      // Predicated region
      $region37: #{iwt_forward.1} parent=5 // pred_check
        _
      $region38: #{iwt_forward.1} parent=5 // pred_check_branch
        %331 = sbr.rel (%p328) target = $region40
      $region39: #{iwt_forward.1} parent=5 // pred_region
        %s332 = ssub.s32 %s20, 1
        %s333 = sand.u32 %s47, 1
        %s334 = scalar_lea.sflag [#allocation3], %s333
        %s335 = sand.u32 %s47, 1
        %s336 = smul.addr %s335, 16
        %s337 = scalar_lea.vmem [#allocation2], %s336
        // Predicated region
        $region41: #{iwt_forward.1} parent=39 // pred_check
          %p338 = pneg %p60
        $region42: #{iwt_forward.1} parent=39 // pred_check_branch
          %340 = sbr.rel (%p338) target = $region44
        $region43: #{iwt_forward.1} parent=39 // pred_region
          %341 = dma.done %s334, 256
        $region44: #{iwt_forward.1} parent=39 // pred_fallthru
          _
        %s342 = sand.u32 %s25, 1
        %s343 = scalar_lea.sflag [#allocation5], %s342
        %s344 = sand.u32 %s77, 1
        %s345 = smul.addr %s344, 16
        %s346 = scalar_lea.vmem [#allocation4], %s345
        // Predicated region
        $region45: #{iwt_forward.1} parent=39 // pred_check
          %p347 = pneg %p90
        $region46: #{iwt_forward.1} parent=39 // pred_check_branch
          %349 = sbr.rel (%p347) target = $region48
        $region47: #{iwt_forward.1} parent=39 // pred_region
          %350 = dma.done %s343, 256
        $region48: #{iwt_forward.1} parent=39 // pred_fallthru
          _
        %s351 = sand.u32 %s25, 1
        %s352 = scalar_lea.sflag [#allocation5], %s351
        %s353 = sand.u32 %s107, 1
        %s354 = smul.addr %s353, 16
        %s355 = scalar_lea.vmem [#allocation6], %s354
        // Predicated region
        $region49: #{iwt_forward.1} parent=39 // pred_check
          %p356 = pneg %p120
        $region50: #{iwt_forward.1} parent=39 // pred_check_branch
          %358 = sbr.rel (%p356) target = $region52
        $region51: #{iwt_forward.1} parent=39 // pred_region
          %359 = dma.done %s352, 256
        $region52: #{iwt_forward.1} parent=39 // pred_fallthru
          _
        %s360 = sand.u32 %s25, 1
        %s361 = scalar_lea.sflag [#allocation8], %s360
        %s362 = sand.u32 %s137, 1
        %s363 = smul.addr %s362, 16
        %s364 = scalar_lea.vmem [#allocation7], %s363
        // Predicated region
        $region53: #{iwt_forward.1} parent=39 // pred_check
          %p365 = pneg %p150
        $region54: #{iwt_forward.1} parent=39 // pred_check_branch
          %367 = sbr.rel (%p365) target = $region56
        $region55: #{iwt_forward.1} parent=39 // pred_region
          %368 = dma.done %s361, 256
        $region56: #{iwt_forward.1} parent=39 // pred_fallthru
          _
        // Predicated region
        $region57: #{iwt_forward.1} parent=39 // pred_check
          %p369 = pneg %p171
        $region58: #{iwt_forward.1} parent=39 // pred_check_branch
          %371 = sbr.rel (%p369) target = $region60
        $region59: #{iwt_forward.1} parent=39 // pred_region
          %372 = dma.done [#allocation8], 1024
        $region60: #{iwt_forward.1} parent=39 // pred_fallthru
          _
        %s373 = sand.u32 %s47, 1
        %s374 = scalar_lea.sflag [#allocation3], %s373
        %s375 = sand.u32 %s47, 1
        %s376 = smul.addr %s375, 16
        %s377 = scalar_lea.vmem [#allocation2], %s376
        %p378 = pneg %p60
        %p379 = pneg %p57
        %s380 = sand.u32 %s25, 1
        %s381 = scalar_lea.sflag [#allocation5], %s380
        %s382 = sand.u32 %s77, 1
        %s383 = smul.addr %s382, 16
        %s384 = scalar_lea.vmem [#allocation4], %s383
        %p385 = pneg %p90
        %p386 = pneg %p87
        %s387 = sand.u32 %s25, 1
        %s388 = scalar_lea.sflag [#allocation5], %s387
        %s389 = sand.u32 %s107, 1
        %s390 = smul.addr %s389, 16
        %s391 = scalar_lea.vmem [#allocation6], %s390
        %p392 = pneg %p120
        %p393 = pneg %p117
        %s394 = sand.u32 %s25, 1
        %s395 = scalar_lea.sflag [#allocation8], %s394
        %s396 = sand.u32 %s137, 1
        %s397 = smul.addr %s396, 16
        %s398 = scalar_lea.vmem [#allocation7], %s397
        %p399 = pneg %p150
        %p400 = pneg %p147
        %p401 = pneg %p171
        %p402 = pneg %p168
        %p403 = pneg %p199
        %p404 = pneg %p196
        %s405 = smul.u32 2, %s30
        %p406 = scmp.lt.s32.totalorder %s29, 1
        %s407 = scalar_select %p406, %s29, 1
        %p408 = scmp.lt.s32.totalorder %s405, 1
        %s409 = scalar_select %p408, %s405, 1
        %s410 = smul.addr %s407, 2
        %s411 = sadd.s32 %s409, %s410
        %s412 = smul.addr %s411, 8
        %s413 = scalar_lea.vmem %s5, %s412
        %s414 = sadd.s32 %s30, 1
        %s415 = sadd.s32 %s30, 2
        %s416 = sadd.s32 %s30, 3
        %s417 = smul.u32 2, %s30
        %p418 = scmp.lt.s32.totalorder %s29, 1
        %s419 = scalar_select %p418, %s29, 1
        %p420 = scmp.lt.s32.totalorder %s417, 1
        %s421 = scalar_select %p420, %s417, 1
        %s422 = smul.addr %s419, 2
        %s423 = sadd.s32 %s421, %s422
        %s424 = smul.addr %s423, 8
        %s425 = scalar_lea.vmem %s5, %s424
        %s426 = smul.u32 2, %s30
        %v427 = vld [vmem:[%s337] sm:$0xff]
        %v428 = vld [vmem:[%s337 + $0x8] sm:$0xff]
        %v429 = vld [vmem:[%s346] sm:$0xff]
        %v430 = vld [vmem:[%s346 + $0x8] sm:$0xff]
        %v431 = vld [vmem:[%s355] sm:$0xff]
        %v432 = vld [vmem:[%s355 + $0x8] sm:$0xff]
        %v433 = vld [vmem:[%s364] sm:$0xff]
        %v434 = vld [vmem:[%s364 + $0x8] sm:$0xff]
        %437 = vrot.lane.b32.xlu0 %v429, 16
        %v438 = vpop.permute.xlu0 %437
        %439 = vrot.lane.b32.xlu0 %v430, 16
        %v440 = vpop.permute.xlu0 %439
        %445 = vrot.lane.b32.xlu0 %v431, 32
        %v446 = vpop.permute.xlu0 %445
        %447 = vrot.lane.b32.xlu0 %v432, 32
        %v448 = vpop.permute.xlu0 %447
        %453 = vrot.lane.b32.xlu0 %v433, 48
        %v454 = vpop.permute.xlu0 %453
        %455 = vrot.lane.b32.xlu0 %v434, 48
        %v456 = vpop.permute.xlu0 %455
        %vm459 = vcmask 130048
        %v460 = vsel %vm459, %v427, %v438
        %v461 = vsel %vm459, %v428, %v440
        %vm462 = vcmask 261120
        %v463 = vsel %vm462, %v460, %v446
        %v464 = vsel %vm462, %v461, %v448
        %vm465 = vcmask 392192
        %v466 = vsel %vm465, %v463, %v454
        %v467 = vsel %vm465, %v464, %v456
        %v468 = vld [vmem:[#allocation9] sm:$0xff]
        %v469 = vld [vmem:[#allocation9 + $0x8] sm:$0xff]
        %v470 = vld [vmem:[#allocation9 + $0x10] sm:$0xff]
        %v471 = vld [vmem:[#allocation9 + $0x18] sm:$0xff]
        %v472 = vld [vmem:[#allocation9 + $0x20] sm:$0xff]
        %v473 = vld [vmem:[#allocation9 + $0x28] sm:$0xff]
        %v474 = vld [vmem:[#allocation9 + $0x30] sm:$0xff]
        %v475 = vld [vmem:[#allocation9 + $0x38] sm:$0xff]
        %vm476 = vcmask 523264
        %v478 = vsel %vm476, %v466, 0
        %v481 = vsel %vm476, %v467, 0
        %483 = vmatprep.subr.mxu0 0.0
        %484 = vmatpush1.msra.mxu0 %v468
        %485 = vmatprep.subr.mxu0 0.0
        %486 = vmatpush1.msra.mxu0 %v469
        %487 = vmatprep.subr.mxu0 0.0
        %488 = vmatpush1.msra.mxu0 %v470
        %489 = vmatprep.subr.mxu0 0.0
        %490 = vmatpush1.msra.mxu0 %v471
        %491 = vmatprep.subr.mxu0 0.0
        %492 = vmatpush1.msra.mxu0 %v472
        %493 = vmatprep.subr.mxu0 0.0
        %494 = vmatpush1.msra.mxu0 %v473
        %495 = vmatprep.subr.mxu0 0.0
        %496 = vmatpush1.msra.mxu0 %v474
        %497 = vmatprep.subr.mxu0 0.0
        %498 = vmatpush1.msra.mxu0 %v475
        %499 = vmatprep.subr.mxu0 0.0
        %500 = vmatpush1.msra.mxu0 0.0
        %501 = vmatprep.subr.mxu0 0.0
        %502 = vmatpush1.msra.mxu0 0.0
        %503 = vmatprep.subr.mxu0 0.0
        %504 = vmatpush1.msra.mxu0 0.0
        %505 = vmatprep.subr.mxu0 0.0
        %506 = vmatpush1.msra.mxu0 0.0
        %507 = vmatprep.subr.mxu0 0.0
        %508 = vmatpush1.msra.mxu0 0.0
        %509 = vmatprep.subr.mxu0 0.0
        %510 = vmatpush1.msra.mxu0 0.0
        %511 = vmatprep.subr.mxu0 0.0
        %512 = vmatpush1.msra.mxu0 0.0
        %513 = vmatprep.subr.mxu0 0.0
        %514 = vmatpush1.msra.mxu0 0.0
        %515 = vmatprep.subr.mxu0 0.0
        %516 = vmatpush1.msra.mxu0 0.0
        %517 = vmatprep.subr.mxu0 0.0
        %518 = vmatpush1.msra.mxu0 0.0
        %519 = vmatprep.subr.mxu0 0.0
        %520 = vmatpush1.msra.mxu0 0.0
        %521 = vmatprep.subr.mxu0 0.0
        %522 = vmatpush1.msra.mxu0 0.0
        %523 = vmatprep.subr.mxu0 0.0
        %524 = vmatpush1.msra.mxu0 0.0
        %525 = vmatprep.subr.mxu0 0.0
        %526 = vmatpush1.msra.mxu0 0.0
        %527 = vmatprep.subr.mxu0 0.0
        %528 = vmatpush1.msra.mxu0 0.0
        %529 = vmatprep.subr.mxu0 0.0
        %530 = vmatpush1.msra.mxu0 0.0
        %531 = vmatprep.subr.mxu0 0.0
        %532 = vmatpush1.msra.mxu0 0.0
        %533 = vmatprep.subr.mxu0 0.0
        %534 = vmatpush1.msra.mxu0 0.0
        %535 = vmatprep.subr.mxu0 0.0
        %536 = vmatpush1.msra.mxu0 0.0
        %537 = vmatprep.subr.mxu0 0.0
        %538 = vmatpush1.msra.mxu0 0.0
        %539 = vmatprep.subr.mxu0 0.0
        %540 = vmatpush1.msra.mxu0 0.0
        %541 = vmatprep.subr.mxu0 0.0
        %542 = vmatpush1.msra.mxu0 0.0
        %543 = vmatprep.subr.mxu0 0.0
        %544 = vmatpush1.msra.mxu0 0.0
        %545 = vmatprep.subr.mxu0 0.0
        %546 = vmatpush1.msra.mxu0 0.0
        %547 = vmatprep.mubr.f32.mxu0 0.0
        %548 = vmatmul.mubr.f32.gmra.mrb[0].mxu0 %v478
        %v549 = vpop.f32.mrb[0].mxu0
        %v550 = vadd.f32 0.0, %v549
        %v551 = vpop.f32.mrb[0].mxu0
        %552 = vmatprep.mubr.f32.mxu0 0.0
        %553 = vmatmul.mubr.f32.gmra.mrb[0].mxu0 %v481
        %v554 = vpop.f32.mrb[0].mxu0
        %v555 = vadd.f32 0.0, %v554
        %v556 = vpop.f32.mrb[0].mxu0
        %557 = vdwg.mxu0
        %558 = vst.msk [vmem:[%s425] sm:$0xff] %vm476, %v550
        %559 = vst.msk [vmem:[%s425 + $0x8] sm:$0xff] %vm476, %v555
        %s560 = smul.u32 2, %s30
        %p561 = scmp.lt.s32.totalorder %s29, 1
        %s562 = scalar_select %p561, %s29, 1
        %p563 = scmp.lt.s32.totalorder %s560, 1
        %s564 = scalar_select %p563, %s560, 1
        %s565 = smul.addr %s562, 2
        %s566 = sadd.s32 %s564, %s565
        %s567 = smul.addr %s566, 8
        %s568 = scalar_lea.vmem %s5, %s567
        // Predicated region
        $region61: #{iwt_forward.1} parent=39 // pred_check
          %p569 = pneg %p196
        $region62: #{iwt_forward.1} parent=39 // pred_check_branch
          %571 = sbr.rel (%p569) target = $region64
        $region63: #{iwt_forward.1} parent=39 // pred_region
          %s572 = smul.u32 2, %s30
        $region64: #{iwt_forward.1} parent=39 // pred_fallthru
          _
      $region40: #{iwt_forward.1} parent=5 // pred_fallthru
        _
      %p573 = scmp.le.s32.totalorder 2, %s20
      // Predicated region
      $region65: #{iwt_forward.1} parent=5 // pred_check
        %p574 = pneg %p573
      $region66: #{iwt_forward.1} parent=5 // pred_check_branch
        %576 = sbr.rel (%p574) target = $region68
      $region67: #{iwt_forward.1} parent=5 // pred_region
        %s577 = ssub.s32 %s20, 2
        // Predicated region
        $region69: #{iwt_forward.1} parent=67 // pred_check
          %p578 = pneg %p202
        $region70: #{iwt_forward.1} parent=67 // pred_check_branch
          %580 = sbr.rel (%p578) target = $region72
        $region71: #{iwt_forward.1} parent=67 // pred_region
          %s581 = smul.u32 2, %s32
          %p582 = scmp.lt.s32.totalorder %s31, 1
          %s583 = scalar_select %p582, %s31, 1
          %p584 = scmp.lt.s32.totalorder %s581, 1
          %s585 = scalar_select %p584, %s581, 1
          %s586 = smul.addr %s583, 2
          %s587 = sadd.s32 %s585, %s586
          %s588 = smul.addr %s587, 8
          %s589 = scalar_lea.vmem %s5, %s588
        $region72: #{iwt_forward.1} parent=67 // pred_fallthru
          _
      $region68: #{iwt_forward.1} parent=5 // pred_fallthru
        _
    $region6: #{iwt_forward.1} parent=1 // loop_footer
      %s24 = sadd.s32 1, %s20
    $region7: #{iwt_forward.1} parent=1 // loop_footer_branch
      %19 = sbr.rel target = $region3
    $region8: #{iwt_forward.1} parent=1 // loop_exit
      _
    %590 = vsyncpa [#allocation3], 1
    %s591 = scalar_lea.sflag [#allocation3], 1
    %592 = vsyncpa %s591, 1
    %593 = vsyncpa [#allocation5], 1
    %s594 = scalar_lea.sflag [#allocation5], 1
    %595 = vsyncpa %s594, 1
    %596 = vsyncpa [#allocation8], 1
    %s597 = scalar_lea.sflag [#allocation8], 1
    %598 = vsyncpa %s597, 1

</llo_original>
